<compile_context>
chip_gen: v6e
topology: v6e:2x2x1
jax: 0.10.0
libtpu: 0.0.40
codegen_flags: <defaults>
</compile_context>

<pallas_src>
import jax
import jax.numpy as jnp
from jax import lax
from jax.experimental import pallas as pl
from jax.experimental.pallas import tpu as pltpu

F32 = jnp.float32

K_IN = 16          # 9 board lanes | 6 action one-hot lanes | 1 bias lane
N_OUT = 8          # 0:3 row logits | 3:6 col logits | 6 reward | 7 pad
TILE_M_MAX = 2048  # per-buffer footprint 2048*16*4B = 128 KiB (v7x-safe)


# ----------------------------- Pallas kernel --------------------------------

def _agent_kernel(b_ref, rc_ref, w_ref, o_ref, x_ref):
    """Fused pack + affine map for all heads.

    b_ref : (TILE_M, 9)  f32   flattened boards
    rc_ref: (TILE_M, 2)  int32 [row, col]  (-1 -> no action / zero one-hot)
    w_ref : (16, 8)      f32   composed weights (biases folded into row 15)
    o_ref : (TILE_M, 8)  f32   [row logits | col logits | reward | pad]
    x_ref : (TILE_M, 16) f32   VMEM scratch: packed activation tile
    """
    tm = x_ref.shape[0]

    rows = rc_ref[:, 0:1]                                   # (tm, 1) int32
    cols = rc_ref[:, 1:2]                                    # (tm, 1) int32
    lane6 = lax.broadcasted_iota(jnp.int32, (tm, 6), 1)      # (tm, 6)
    act = jnp.where(
        ((lane6 < 3) & (lane6 == rows)) | ((lane6 >= 3) & (lane6 == cols + 3)),
        jnp.float32(1.0), jnp.float32(0.0))                  # (tm, 6) one-hot

    # Pack [board | action one-hot | 1] straight into VMEM scratch.
    x_ref[:, 0:9] = b_ref[...]
    x_ref[:, 9:15] = act
    x_ref[:, 15:16] = jnp.ones((tm, 1), F32)

    # One MXU pass computes every head (biases folded via the constant lane).
    o_ref[...] = jnp.dot(x_ref[...], w_ref[...], preferred_element_type=F32)


def _forward_padded(w_all, boards2, rc):
    """boards2: (B, 9) f32, rc: (B, 2) int32 -> (B_pad, 8) f32."""
    B = boards2.shape[0]
    B_pad = ((B + 7) // 8) * 8
    if B_pad != B:
        boards2 = jnp.pad(boards2, ((0, B_pad - B), (0, 0)))
        rc = jnp.pad(rc, ((0, B_pad - B), (0, 0)), constant_values=-1)

    tile_m = min(TILE_M_MAX, B_pad)
    grid = (pl.cdiv(B_pad, tile_m),)

    return pl.pallas_call(
        _agent_kernel,
        out_shape=jax.ShapeDtypeStruct((B_pad, N_OUT), F32),
        grid=grid,
        in_specs=[
            pl.BlockSpec((tile_m, 9), lambda i: (i, 0)),       # boards
            pl.BlockSpec((tile_m, 2), lambda i: (i, 0)),       # [row, col]
            pl.BlockSpec((K_IN, N_OUT), lambda i: (0, 0)),     # weights (resident)
        ],
        out_specs=pl.BlockSpec((tile_m, N_OUT), lambda i: (i, 0)),
        scratch_shapes=[pltpu.VMEM((tile_m, K_IN), F32)],
        compiler_params=pltpu.CompilerParams(
            dimension_semantics=("parallel",)),                # v7x: 2 TCs
    )(boards2, rc, w_all)


# ------------------------------ param helpers --------------------------------

def init_params(key):
    """Deterministic synthetic parameters with PyTorch module shapes."""
    keys = jax.random.split(key, 12)

    def w(k, shape):
        return jax.random.normal(k, shape, F32) * 0.1

    return dict(
        conv_w=w(keys[0], (8, 1, 3, 3)),   # nn.Conv2d(1, 8, 3)
        conv_b=w(keys[1], (8,)),
        parser_w=w(keys[2], (9, 8)),       # nn.Linear(8, 9)
        parser_b=w(keys[3], (9,)),
        row_w=w(keys[4], (3, 9)),          # nn.Linear(9, 3)
        row_b=w(keys[5], (3,)),
        col_w=w(keys[6], (3, 9)),          # nn.Linear(9, 3)
        col_b=w(keys[7], (3,)),
        action_w=w(keys[8], (9, 6)),       # nn.Linear(6, 9)
        action_b=w(keys[9], (9,)),
        reward_w=w(keys[10], (1, 18)),     # nn.Linear(18, 1)
        reward_b=w(keys[11], (1,)),
    )


def pack_params(p):
    """Compose the entire affine chain into one (16, 8) weight matrix."""
    Wc = p["conv_w"].reshape(8, 9).T.astype(F32)    # conv as (9 -> 8) matmul
    bc = p["conv_b"].astype(F32)
    Wp = p["parser_w"].T.astype(F32)                # (8, 9)
    bp = p["parser_b"].astype(F32)
    Wrow = p["row_w"].T.astype(F32)                 # (9, 3)
    brow = p["row_b"].astype(F32)
    Wcol = p["col_w"].T.astype(F32)                 # (9, 3)
    bcol = p["col_b"].astype(F32)
    Wa = p["action_w"].T.astype(F32)                # (6, 9)
    ba = p["action_b"].astype(F32)
    Wr = p["reward_w"].astype(F32)                  # (1, 18)
    br = p["reward_b"].astype(F32)

    # board -> embedding (conv + parser folded)
    W_embed = Wc @ Wp                               # (9, 9)
    b_embed = bc @ Wp + bp                          # (9,)

    # prediction heads fused into one (9 -> 6) map
    W_heads = jnp.concatenate([Wrow, Wcol], axis=1)     # (9, 6)
    b_heads = jnp.concatenate([brow, bcol])             # (6,)
    W_pred = W_embed @ W_heads                          # (9, 6)
    b_pred = b_embed @ W_heads + b_heads                # (6,)

    # reward path: board half and action half folded separately
    Wr_b = Wr[:, :9].T                                  # (9, 1)
    Wr_a = Wr[:, 9:].T                                  # (9, 1)
    W_rew_board = W_embed @ Wr_b                        # (9, 1)
    W_rew_act = Wa @ Wr_a                               # (6, 1)
    b_rew = b_embed @ Wr_b + ba @ Wr_a + br             # (1,)

    W_all = jnp.zeros((K_IN, N_OUT), F32)
    W_all = W_all.at[0:9, 0:6].set(W_pred)              # board -> row/col logits
    W_all = W_all.at[0:9, 6:7].set(W_rew_board)         # board -> reward
    W_all = W_all.at[9:15, 6:7].set(W_rew_act)          # action -> reward
    W_all = W_all.at[15, 0:6].set(b_pred)               # bias lane
    W_all = W_all.at[15, 6].set(b_rew[0])
    return W_all


# ------------------------------- wrappers -------------------------------------

def _as_boards(boards):
    return jnp.asarray(boards, F32).reshape(-1, 9)


def _as_rc(rows, cols):
    return jnp.stack([jnp.asarray(rows, jnp.int32).reshape(-1),
                      jnp.asarray(cols, jnp.int32).reshape(-1)], axis=-1)


@jax.jit
def board_to_prediction(w_all, boards):
    """boards (3,3)/(B,3,3)/(B,9) -> (row_logits, col_logits)."""
    b2 = _as_boards(boards)
    B = b2.shape[0]
    rc = jnp.full((B, 2), -1, jnp.int32)        # no action -> zero one-hot
    out = _forward_padded(w_all, b2, rc)
    return out[:B, 0:3], out[:B, 3:6]


@jax.jit
def action_to_reward(w_all, boards, rows, cols):
    """boards + (row, col) -> reward (B, 1)."""
    b2 = _as_boards(boards)
    B = b2.shape[0]
    out = _forward_padded(w_all, b2, _as_rc(rows, cols))
    return out[:B, 6:7]


@jax.jit
def forward_all(w_all, boards, rows, cols):
    """Merged single-launch wrapper: (row_logits, col_logits, reward)."""
    b2 = _as_boards(boards)
    B = b2.shape[0]
    out = _forward_padded(w_all, b2, _as_rc(rows, cols))
    return out[:B, 0:3], out[:B, 3:6], out[:B, 6:7]


def forward(w_all, board, row=None, col=None):
    # Same dispatch as SmartAgent.forward
    if row is not None and col is not None:
        return action_to_reward(w_all, board, row, col)
    return list(board_to_prediction(w_all, board))


# ------------------------------ pure-JAX ref ----------------------------------

def _ref_forward(p, board, row=None, col=None):
    bvec = board.reshape(1, 9).astype(F32)
    conv_out = bvec @ p["conv_w"].reshape(8, 9).T + p["conv_b"]   # (1, 8)
    embed = conv_out @ p["parser_w"].T + p["parser_b"]            # (1, 9)
    if row is not None and col is not None:
        act = jnp.zeros((1, 6), F32).at[0, row].set(1.0).at[0, 3 + col].set(1.0)
        a_out = act @ p["action_w"].T + p["action_b"]
        comb = jnp.concatenate([embed, a_out], axis=1)
        return comb @ p["reward_w"].T + p["reward_b"]
    o_row = embed @ p["row_w"].T + p["row_b"]
    o_col = embed @ p["col_w"].T + p["col_b"]
    return o_row, o_col


# --------------------------------- main ---------------------------------------

if __name__ == "__main__":
    key = jax.random.PRNGKey(0)
    pkey, bkey, rkey, ckey = jax.random.split(key, 4)

    params = init_params(pkey)
    w_all = pack_params(params)

    # Single 3x3 tic-tac-toe board with entries in {-1, 0, 1}
    board = jax.random.randint(bkey, (3, 3), -1, 2).astype(F32)

    # Prediction path (no row/col) and reward path (row=1, col=2)
    o_row, o_col = forward(w_all, board)
    reward = forward(w_all, board, row=1, col=2)

    # Batched path: 5 boards + 5 (row, col) actions, all heads in ONE launch.
    B = 5
    boards = jax.random.randint(jax.random.fold_in(bkey, 1),
                                (B, 3, 3), -1, 2).astype(F32)
    rows = jax.random.randint(rkey, (B,), 0, 3)
    cols = jax.random.randint(ckey, (B,), 0, 3)
    b_row, b_col, b_rew = forward_all(w_all, boards, rows, cols)

    jax.block_until_ready((o_row, o_col, reward, b_row, b_col, b_rew))

    # Verify against pure-JAX reference of the PyTorch math
    r_row, r_col = _ref_forward(params, board)
    r_reward = _ref_forward(params, board, row=1, col=2)
    assert o_row.shape == (1, 3) and o_col.shape == (1, 3) and reward.shape == (1, 1)
    assert jnp.allclose(o_row, r_row, atol=1e-5), (o_row, r_row)
    assert jnp.allclose(o_col, r_col, atol=1e-5), (o_col, r_col)
    assert jnp.allclose(reward, r_reward, atol=1e-5), (reward, r_reward)

    assert b_row.shape == (B, 3) and b_col.shape == (B, 3) and b_rew.shape == (B, 1)
    for i in range(B):
        rr, rc = _ref_forward(params, boards[i])
        rv = _ref_forward(params, boards[i], row=int(rows[i]), col=int(cols[i]))
        assert jnp.allclose(b_row[i:i + 1], rr, atol=1e-5), (i, b_row[i], rr)
        assert jnp.allclose(b_col[i:i + 1], rc, atol=1e-5), (i, b_col[i], rc)
        assert jnp.allclose(b_rew[i:i + 1], rv, atol=1e-5), (i, b_rew[i], rv)

    print("KERNEL_OK")
</pallas_src>

<mosaic_0001>
module attributes {stable_mosaic.version = 11 : i64} {
  func.func @_agent_kernel(%arg0: i32, %arg1: memref<8x9xf32, #tpu.memory_space<vmem>>, %arg2: memref<8x2xi32, #tpu.memory_space<vmem>>, %arg3: memref<16x8xf32, #tpu.memory_space<vmem>>, %arg4: memref<8x8xf32, #tpu.memory_space<vmem>>, %arg5: memref<8x16xf32, #tpu.memory_space<vmem>>) attributes {dimension_semantics = [#tpu.dimension_semantics<parallel>], iteration_bounds = array<i64: 1>, scalar_prefetch = 0 : i64, scratch_operands = 1 : i64, tpu.core_type = #tpu.core_type<tc>, window_params = [{transform_indices = @transform_0, window_bounds = array<i64: 8, 9>}, {transform_indices = @transform_1, window_bounds = array<i64: 8, 2>}, {pipeline_mode = #tpu.pipeline_mode<synchronous>, transform_indices = @transform_2, window_bounds = array<i64: 16, 8>}, {transform_indices = @transform_3, window_bounds = array<i64: 8, 8>}]} {
    %c0 = arith.constant 0 : index
    %c0_0 = arith.constant 0 : index
    %0 = vector.load %arg2[%c0, %c0_0] : memref<8x2xi32, #tpu.memory_space<vmem>>, vector<8x1xi32>
    %c0_1 = arith.constant 0 : index
    %c1 = arith.constant 1 : index
    %1 = vector.load %arg2[%c0_1, %c1] : memref<8x2xi32, #tpu.memory_space<vmem>>, vector<8x1xi32>
    %2 = tpu.iota {dimensions = array<i32: 1>} : vector<8x6xi32>
    %c3_i32 = arith.constant 3 : i32
    %3 = vector.broadcast %c3_i32 : i32 to vector<8x6xi32>
    %4 = arith.cmpi slt, %2, %3 : vector<8x6xi32>
    %5 = vector.broadcast %0 : vector<8x1xi32> to vector<8x6xi32>
    %6 = arith.cmpi eq, %2, %5 : vector<8x6xi32>
    %7 = arith.andi %4, %6 : vector<8x6xi1>
    %c3_i32_2 = arith.constant 3 : i32
    %8 = vector.broadcast %c3_i32_2 : i32 to vector<8x6xi32>
    %9 = arith.cmpi sge, %2, %8 : vector<8x6xi32>
    %c3_i32_3 = arith.constant 3 : i32
    %10 = vector.broadcast %c3_i32_3 : i32 to vector<8x1xi32>
    %11 = arith.addi %1, %10 : vector<8x1xi32>
    %12 = vector.broadcast %11 : vector<8x1xi32> to vector<8x6xi32>
    %13 = arith.cmpi eq, %2, %12 : vector<8x6xi32>
    %14 = arith.andi %9, %13 : vector<8x6xi1>
    %15 = arith.ori %7, %14 : vector<8x6xi1>
    %cst = arith.constant 1.000000e+00 : f32
    %cst_4 = arith.constant 0.000000e+00 : f32
    %16 = vector.broadcast %cst : f32 to vector<8x6xf32>
    %17 = vector.broadcast %cst_4 : f32 to vector<8x6xf32>
    %18 = arith.select %15, %16, %17 : vector<8x6xi1>, vector<8x6xf32>
    %c0_5 = arith.constant 0 : index
    %c0_6 = arith.constant 0 : index
    %19 = vector.load %arg1[%c0_5, %c0_6] : memref<8x9xf32, #tpu.memory_space<vmem>>, vector<8x9xf32>
    %c0_7 = arith.constant 0 : index
    %c0_8 = arith.constant 0 : index
    %20 = vector.load %arg5[%c0_7, %c0_8] : memref<8x16xf32, #tpu.memory_space<vmem>>, vector<8x9xf32>
    tpu.vector_store %arg5[%c0_7, %c0_8], %19 {strides = array<i32>} : memref<8x16xf32, #tpu.memory_space<vmem>>, vector<8x9xf32>,
    %c0_9 = arith.constant 0 : index
    %c9 = arith.constant 9 : index
    %21 = vector.load %arg5[%c0_9, %c9] : memref<8x16xf32, #tpu.memory_space<vmem>>, vector<8x6xf32>
    tpu.vector_store %arg5[%c0_9, %c9], %18 {strides = array<i32>} : memref<8x16xf32, #tpu.memory_space<vmem>>, vector<8x6xf32>,
    %cst_10 = arith.constant 1.000000e+00 : f32
    %22 = vector.broadcast %cst_10 : f32 to vector<8x1xf32>
    %c0_11 = arith.constant 0 : index
    %c15 = arith.constant 15 : index
    %23 = vector.load %arg5[%c0_11, %c15] : memref<8x16xf32, #tpu.memory_space<vmem>>, vector<8x1xf32>
    tpu.vector_store %arg5[%c0_11, %c15], %22 {strides = array<i32>} : memref<8x16xf32, #tpu.memory_space<vmem>>, vector<8x1xf32>,
    %c0_12 = arith.constant 0 : index
    %c0_13 = arith.constant 0 : index
    %24 = vector.load %arg5[%c0_12, %c0_13] : memref<8x16xf32, #tpu.memory_space<vmem>>, vector<8x16xf32>
    %c0_14 = arith.constant 0 : index
    %c0_15 = arith.constant 0 : index
    %25 = vector.load %arg3[%c0_14, %c0_15] : memref<16x8xf32, #tpu.memory_space<vmem>>, vector<16x8xf32>
    %cst_16 = arith.constant dense<0.000000e+00> : vector<8x8xf32>
    %26 = tpu.matmul %24, %25, %cst_16 {dimension_numbers = #tpu.dot_dimension_numbers<[1], [0], [0], [1], [0, 0, 1, 1], [], []>} : vector<8x16xf32>, vector<16x8xf32>, vector<8x8xf32> -> vector<8x8xf32>
    %c0_17 = arith.constant 0 : index
    %c0_18 = arith.constant 0 : index
    %27 = vector.load %arg4[%c0_17, %c0_18] : memref<8x8xf32, #tpu.memory_space<vmem>>, vector<8x8xf32>
    tpu.vector_store %arg4[%c0_17, %c0_18], %26 {strides = array<i32>} : memref<8x8xf32, #tpu.memory_space<vmem>>, vector<8x8xf32>,
    return
  }
  func.func @transform_0(%arg0: i32) -> (i32, i32) {
    %c0_i32 = arith.constant 0 : i32
    %c0_i32_0 = arith.constant 0 : i32
    return %arg0, %c0_i32 : i32, i32
  }
  func.func @transform_1(%arg0: i32) -> (i32, i32) {
    %c0_i32 = arith.constant 0 : i32
    %c0_i32_0 = arith.constant 0 : i32
    return %arg0, %c0_i32 : i32, i32
  }
  func.func @transform_2(%arg0: i32) -> (i32, i32) {
    %c0_i32 = arith.constant 0 : i32
    %c0_i32_0 = arith.constant 0 : i32
    %c0_i32_1 = arith.constant 0 : i32
    return %c0_i32, %c0_i32_0 : i32, i32
  }
  func.func @transform_3(%arg0: i32) -> (i32, i32) {
    %c0_i32 = arith.constant 0 : i32
    %c0_i32_0 = arith.constant 0 : i32
    return %arg0, %c0_i32 : i32, i32
  }
}

</mosaic_0001>

<llo_original>
// kernel: board_to_prediction.1
$region0: #{board_to_prediction.1}
  #allocation0 [shape = 'u32[]', space=smem, size = 0x4, offset = 0x4, fixed_abs, tag = 'smem constant byte address 0x4 - core index']
  #allocation1 [shape = 'u32[144,128]{1,0:T(1,128)}', space=vmem, size = 0x12000, scoped, tag = 'internal scratch']
  #allocation2 [shape = 'f32[8,16]{1,0:T(8,128)}', space=vmem, size = 0x1000, scoped, tag = 'scratch operand']
  %s0 = inlined_call_operand.vmem [shape: f32[8,9], index: 0, kind: input, shape index: {}]
  %s1 = inlined_call_operand.vmem [shape: s32[8,2], index: 1, kind: input, shape index: {}]
  %s2 = inlined_call_operand.vmem [shape: f32[16,8], index: 2, kind: input, shape index: {}]
  %s3 = inlined_call_operand.vmem [shape: f32[8,8], index: 3, kind: output, shape index: {}]
  %s4 = sld [smem:[#allocation0]]
  $region22: #{board_to_prediction.1} parent=0
    _
  %s6 = ssub.s32 1, %s4
  %s7 = scalar_select 0, %s6, %s4
  // Predicated region
  $region2: #{board_to_prediction.1} parent=0 // pred_check
    _
  $region3: #{board_to_prediction.1} parent=0 // pred_check_branch
    %9 = sbr.rel (0) target = $region5
  $region4: #{board_to_prediction.1} parent=0 // pred_region
    _
  $region5: #{board_to_prediction.1} parent=0 // pred_fallthru
    _
  // Predicated region
  $region6: #{board_to_prediction.1} parent=0 // pred_check
    _
  $region7: #{board_to_prediction.1} parent=0 // pred_check_branch
    %11 = sbr.rel (0) target = $region9
  $region8: #{board_to_prediction.1} parent=0 // pred_region
    _
  $region9: #{board_to_prediction.1} parent=0 // pred_fallthru
    _
  // Predicated region
  $region10: #{board_to_prediction.1} parent=0 // pred_check
    _
  $region11: #{board_to_prediction.1} parent=0 // pred_check_branch
    %13 = sbr.rel (0) target = $region13
  $region12: #{board_to_prediction.1} parent=0 // pred_region
    _
  $region13: #{board_to_prediction.1} parent=0 // pred_fallthru
    _
  %v14 = vld [vmem:[%s1] sm:$0xff]
  %v15 = vlaneseq
  %v16 = vand.u32 %v15, 127
  %vm17 = vcmp.lt.s32.totalorder %v16, 3
  %18 = vset.pattern.permute.xlu0 0
  %19 = vperm.xlu0 %18, %v14
  %v20 = vpop.permute.xlu0 %19
  %vm21 = vcmp.eq.s32.totalorder %v16, %v20
  %vm22 = vmand %vm17, %vm21
  %vm23 = vcmp.ge.s32.totalorder %v16, 3
  %v24 = vadd.s32 %v14, 3
  %25 = vset.pattern.permute.xlu0 1
  %26 = vperm.xlu0 %25, %v24
  %v27 = vpop.permute.xlu0 %26
  %vm28 = vcmp.eq.s32.totalorder %v16, %v27
  %vm29 = vmand %vm23, %vm28
  %vm30 = vmor %vm22, %vm29
  %v31 = vsel %vm30, 1.0, 0.0
  %v32 = vld [vmem:[%s0] sm:$0xff]
  %vm33 = vcmask 72704
  %34 = vst.msk [vmem:[#allocation2] sm:$0xff] %vm33, %v32
  %36 = vrot.lane.b32.xlu0 %v31, 9
  %v37 = vpop.permute.xlu0 %36
  %vm39 = vcmask 121928
  %40 = vst.msk [vmem:[#allocation2] sm:$0xff] %vm39, %v37
  %vm41 = vcmask 130168
  %42 = vst.msk [vmem:[#allocation2] sm:$0xff] %vm41, 1.0
  %v43 = vld [vmem:[#allocation2] sm:$0xff]
  %v44 = vld [vmem:[%s2] sm:$0xff]
  %v45 = vld [vmem:[%s2 + $0x8] sm:$0xff]
  %vm46 = vcmask 130048
  %v48 = vsel %vm46, %v43, 0
  %50 = vmatprep.subr.mxu0 0.0
  %51 = vmatpush1.msra.mxu0 0.0
  %52 = vmatprep.subr.mxu0 0.0
  %53 = vmatpush1.msra.mxu0 0.0
  %54 = vmatprep.subr.mxu0 0.0
  %55 = vmatpush1.msra.mxu0 0.0
  %56 = vmatprep.subr.mxu0 0.0
  %57 = vmatpush1.msra.mxu0 0.0
  %58 = vmatprep.subr.mxu0 0.0
  %59 = vmatpush1.msra.mxu0 0.0
  %60 = vmatprep.subr.mxu0 0.0
  %61 = vmatpush1.msra.mxu0 0.0
  %62 = vmatprep.subr.mxu0 0.0
  %63 = vmatpush1.msra.mxu0 0.0
  %64 = vmatprep.subr.mxu0 0.0
  %65 = vmatpush1.msra.mxu0 0.0
  %66 = vmatprep.subr.mxu0 0.0
  %67 = vmatpush1.msra.mxu0 0.0
  %68 = vmatprep.subr.mxu0 0.0
  %69 = vmatpush1.msra.mxu0 0.0
  %70 = vmatprep.subr.mxu0 0.0
  %71 = vmatpush1.msra.mxu0 0.0
  %72 = vmatprep.subr.mxu0 0.0
  %73 = vmatpush1.msra.mxu0 0.0
  %74 = vmatprep.subr.mxu0 0.0
  %75 = vmatpush1.msra.mxu0 0.0
  %76 = vmatprep.subr.mxu0 0.0
  %77 = vmatpush1.msra.mxu0 0.0
  %78 = vmatprep.subr.mxu0 0.0
  %79 = vmatpush1.msra.mxu0 %v45
  %80 = vmatprep.subr.mxu0 0.0
  %81 = vmatpush1.msra.mxu0 %v44
  %82 = vmatprep.subr.mxu0 0.0
  %83 = vmatpush2.msra.mxu0 0.0
  %84 = vmatprep.subr.mxu0 0.0
  %85 = vmatpush2.msra.mxu0 0.0
  %86 = vmatprep.subr.mxu0 0.0
  %87 = vmatpush2.msra.mxu0 0.0
  %88 = vmatprep.subr.mxu0 0.0
  %89 = vmatpush2.msra.mxu0 0.0
  %90 = vmatprep.subr.mxu0 0.0
  %91 = vmatpush2.msra.mxu0 0.0
  %92 = vmatprep.subr.mxu0 0.0
  %93 = vmatpush2.msra.mxu0 0.0
  %94 = vmatprep.subr.mxu0 0.0
  %95 = vmatpush2.msra.mxu0 0.0
  %96 = vmatprep.subr.mxu0 0.0
  %97 = vmatpush2.msra.mxu0 0.0
  %98 = vmatprep.subr.mxu0 0.0
  %99 = vmatpush2.msra.mxu0 0.0
  %100 = vmatprep.subr.mxu0 0.0
  %101 = vmatpush2.msra.mxu0 0.0
  %102 = vmatprep.subr.mxu0 0.0
  %103 = vmatpush2.msra.mxu0 0.0
  %104 = vmatprep.subr.mxu0 0.0
  %105 = vmatpush2.msra.mxu0 0.0
  %106 = vmatprep.subr.mxu0 0.0
  %107 = vmatpush2.msra.mxu0 0.0
  %108 = vmatprep.subr.mxu0 0.0
  %109 = vmatpush2.msra.mxu0 0.0
  %110 = vmatprep.subr.mxu0 0.0
  %111 = vmatpush2.msra.mxu0 0.0
  %112 = vmatprep.subr.mxu0 0.0
  %113 = vmatpush2.msra.mxu0 0.0
  %114 = vmatprep.mubr.f32.mxu0 0.0
  %115 = vmatmul.mubr.f32.gmra.mxu0 %v48
  %v116 = vpop.f32.mrf.mxu0
  %v117 = vadd.f32 0.0, %v116
  %v118 = vpop.f32.mrf.mxu0
  %119 = vdwg.mxu0
  %vm120 = vcmask 64512
  %121 = vst.msk [vmem:[%s3] sm:$0xff] %vm120, %v117
  // Predicated region
  $region14: #{board_to_prediction.1} parent=0 // pred_check
    _
  $region15: #{board_to_prediction.1} parent=0 // pred_check_branch
    %123 = sbr.rel (0) target = $region17
  $region16: #{board_to_prediction.1} parent=0 // pred_region
    _
  $region17: #{board_to_prediction.1} parent=0 // pred_fallthru
    _
  // Predicated region
  $region18: #{board_to_prediction.1} parent=0 // pred_check
    _
  $region19: #{board_to_prediction.1} parent=0 // pred_check_branch
    %125 = sbr.rel (0) target = $region21
  $region20: #{board_to_prediction.1} parent=0 // pred_region
    _
  $region21: #{board_to_prediction.1} parent=0 // pred_fallthru
    _

</llo_original>
